<compile_context>
chip_gen: v5e
topology: v5e:2x2
jax: 0.10.0
libtpu: 0.0.40
codegen_flags: <defaults>
</compile_context>

<pallas_src>
import functools

import jax
import jax.numpy as jnp
from jax.experimental import pallas as pl
from jax.experimental.pallas import tpu as pltpu

BN_EPS = 1e-5
MATMUL_DTYPE = jnp.bfloat16   # MXU operand dtype (accumulation is always f32)


def _round_up(x, m):
    return ((x + m - 1) // m) * m


# ------------------------------- kernel -------------------------------------

def _sslnet_kernel(x_ref, bnw_ref, bngb_ref, linw_ref, linb_ref,
                   qkvw_ref, qkvb_ref, o_ref, *,
                   n_rows, n_enc_blocks, n_head_blocks):
    """Both SSLNet branches (clean + corrupted) fused into one invocation.

    Activations are kept as a merged (2*N, D_PAD) slab so every shared-weight Linear
    is a single MXU pass; BatchNorm statistics and the batch-axis self-attention are
    computed per branch on a (2, N, D_PAD) view.
    """
    f32, mdt = jnp.float32, MATMUL_DTYPE
    B, N = 2, n_rows
    D = qkvw_ref.shape[0]                 # padded feature width (128 lanes)

    def mxu(a2, w):
        # bf16 operands, f32 accumulation on the MXU.  a2: (B*N, Din), w: (Din, Dout).
        return jnp.dot(a2.astype(mdt), w, preferred_element_type=f32)

    def bn_relu_block(h2, li):
        # Linear (bias dropped: a pre-BN per-feature bias is cancelled exactly by the
        # BN mean subtraction) -> BatchNorm1d training stats (per branch) -> ReLU.
        y = mxu(h2, bnw_ref[li]).reshape(B, N, D)                       # (B,N,D) f32
        mean = jnp.sum(y, axis=1, keepdims=True) * (1.0 / N)            # (B,1,D)
        yc = y - mean
        var = jnp.sum(yc * yc, axis=1, keepdims=True) * (1.0 / N)       # two-pass var
        gb = bngb_ref[li]                                               # (2, D) f32
        scale = gb[0:1, :] * jax.lax.rsqrt(var + BN_EPS)                # gamma*rsqrt
        out = jnp.maximum(yc * scale + gb[1:2, :], 0.0)                 # single FMA+ReLU
        return out.reshape(B * N, D)

    def linear(h2, li):
        return mxu(h2, linw_ref[li]) + linb_ref[li:li + 1, :]           # static Ref slice

    # -------- encoder MLP (shared weights; both branches as one (2N, D) slab) -----
    h = x_ref[...]                                   # (2N, D) bf16 (pre-cast in wrapper)
    for li in range(n_enc_blocks):
        h = bn_relu_block(h, li)
    emb = linear(h, 0)                               # (2N, D) f32

    # -------- self-attention over the batch axis, per branch ----------------------
    # q/k/v fused into one (D, 3D) matmul; 1/scale pre-folded into the q slice.
    qkv = mxu(emb, qkvw_ref[...]) + qkvb_ref[...]                        # (2N, 3D) f32
    q = qkv[:, 0 * D:1 * D].reshape(B, N, D)
    k = qkv[:, 1 * D:2 * D].reshape(B, N, D)
    v = qkv[:, 2 * D:3 * D].reshape(B, N, D)
    scores = jnp.einsum('bqd,bkd->bqk', q.astype(mdt), k.astype(mdt),
                        preferred_element_type=f32)                      # (B, N, N)
    p = jnp.exp(scores - jnp.max(scores, axis=-1, keepdims=True))
    attn_w = p * pl.reciprocal(jnp.sum(p, axis=-1, keepdims=True), approx=True)
    attn_out = jnp.einsum('bqk,bkd->bqd', attn_w.astype(mdt), v.astype(mdt),
                          preferred_element_type=f32)                    # (B, N, D)

    # -------- residual add + pretraining head MLP ---------------------------------
    h = emb + attn_out.reshape(B * N, D)
    for li in range(n_head_blocks):
        h = bn_relu_block(h, n_enc_blocks + li)
    o_ref[...] = linear(h, 1).reshape(B, N, D).astype(o_ref.dtype)


# ------------------------------- wrapper -------------------------------------

@functools.partial(jax.jit,
                   static_argnames=("n_enc_blocks", "n_head_blocks", "emb_dim", "d_pad"))
def sslnet_forward(x, x_corr, packed, *, n_enc_blocks, n_head_blocks, emb_dim, d_pad):
    n, input_dim = x.shape
    # One stack + one pad; pre-cast to bf16 (first in-kernel op is a bf16 MXU matmul,
    # so this is numerically identical and halves the input DMA).
    x_both = jnp.pad(jnp.stack([x, x_corr]).astype(MATMUL_DTYPE),
                     ((0, 0), (0, 0), (0, d_pad - input_dim)))
    x_both = x_both.reshape(2 * n, d_pad)

    kernel = functools.partial(_sslnet_kernel, n_rows=n,
                               n_enc_blocks=n_enc_blocks, n_head_blocks=n_head_blocks)

    # TODO(synk): everything (activations + the per-branch (N,N) f32 scores) is
    # VMEM-resident with no tiling; for large batches add batch tiling / flash-style
    # streaming before the scores outgrow scoped VMEM (v7x TCs only have 64 MiB).
    vmem = pltpu.MemorySpace.VMEM
    out = pl.pallas_call(
        kernel,
        out_shape=jax.ShapeDtypeStruct((2, n, d_pad), jnp.float32),
        in_specs=[pl.BlockSpec(memory_space=vmem) for _ in range(7)],
        out_specs=pl.BlockSpec(memory_space=vmem),
    )(x_both, packed["bn_w"], packed["bn_gb"], packed["lin_w"], packed["lin_b"],
      packed["qkv_w"], packed["qkv_b"])

    return out[0, :, :emb_dim], out[1, :, :emb_dim]


# ------------------------------ parameters -----------------------------------

def init_params(key, input_dim, emb_dim, num_hidden, head_depth):
    """PyTorch-layout parameters (Linear weight (out,in), default BN affine init)."""
    keys = iter(jax.random.split(key, 2 * (num_hidden + head_depth) + 8))

    def linear_init(out_dim, in_dim):
        kw, kb = jax.random.split(next(keys))
        bound = 1.0 / (in_dim ** 0.5)
        w = jax.random.uniform(kw, (out_dim, in_dim), jnp.float32, -bound, bound)
        b = jax.random.uniform(kb, (out_dim,), jnp.float32, -bound, bound)
        return w, b

    def mlp_params(in_dim, hidden_dim, n_layers):
        blocks, d = [], in_dim
        for _ in range(n_layers - 1):
            w, b = linear_init(hidden_dim, d)
            blocks.append(dict(w=w, b=b,
                               gamma=jnp.ones((hidden_dim,), jnp.float32),
                               beta=jnp.zeros((hidden_dim,), jnp.float32)))
            d = hidden_dim
        wf, bf = linear_init(hidden_dim, d)
        return dict(blocks=blocks, final=dict(w=wf, b=bf))

    encoder = mlp_params(input_dim, emb_dim, num_hidden)
    head = mlp_params(emb_dim, emb_dim, head_depth)
    wq, bq = linear_init(emb_dim, emb_dim)
    wk, bk = linear_init(emb_dim, emb_dim)
    wv, bv = linear_init(emb_dim, emb_dim)
    attn = dict(wq=wq, bq=bq, wk=wk, bk=bk, wv=wv, bv=bv,
                scale=jnp.sqrt(jnp.float32(emb_dim)))
    return dict(encoder=encoder, head=head, attn=attn)


def pack_params(params, d_pad):
    """Pad to 128 lanes, pre-transpose Linear weights, merge per-layer params, fuse
    q/k/v along the output dim, fold 1/scale into the q slice (f32, before the bf16
    cast), cast matmul operands to bf16, drop the BN-cancelled Linear biases."""
    f32 = jnp.float32

    def pad_wt(w, scale=1.0):   # torch Linear weight (out,in) -> zero-padded (d_pad,d_pad) W^T
        w_t = jnp.asarray(w, f32).T * scale
        return jnp.zeros((d_pad, d_pad), f32).at[: w_t.shape[0], : w_t.shape[1]].set(w_t)

    def pad_row(v, scale=1.0):
        v = jnp.asarray(v, f32) * scale
        return jnp.zeros((d_pad,), f32).at[: v.shape[0]].set(v)

    bn_layers = params["encoder"]["blocks"] + params["head"]["blocks"]
    a = params["attn"]
    inv_scale = 1.0 / a["scale"]
    return dict(
        bn_w=jnp.stack([pad_wt(p["w"]) for p in bn_layers]).astype(MATMUL_DTYPE),
        bn_gb=jnp.stack([jnp.stack([pad_row(p["gamma"]), pad_row(p["beta"])])
                         for p in bn_layers]),
        lin_w=jnp.stack([pad_wt(params["encoder"]["final"]["w"]),
                         pad_wt(params["head"]["final"]["w"])]).astype(MATMUL_DTYPE),
        lin_b=jnp.stack([pad_row(params["encoder"]["final"]["b"]),
                         pad_row(params["head"]["final"]["b"])]),
        qkv_w=jnp.concatenate([pad_wt(a["wq"], inv_scale), pad_wt(a["wk"]),
                               pad_wt(a["wv"])], axis=1).astype(MATMUL_DTYPE),
        qkv_b=jnp.concatenate([pad_row(a["bq"], inv_scale), pad_row(a["bk"]),
                               pad_row(a["bv"])])[None, :],
    )


# ------------------------------ corruption -----------------------------------

def corrupt_input(key, x, features_low, features_high, corruption_len):
    """SCARF corruption: per row, replace `corruption_len` random feature positions
    with samples from per-feature Uniform marginals."""
    # TODO(synk): uses JAX RNG; not bit-identical to torch.randperm / Uniform.sample.
    n, m = x.shape
    k_mask, k_samp = jax.random.split(key)
    u = jax.random.uniform(k_mask, (n, m))
    ranks = jnp.argsort(jnp.argsort(u, axis=1), axis=1)
    mask = ranks < corruption_len
    x_random = features_low + (features_high - features_low) * jax.random.uniform(k_samp, (n, m))
    return jnp.where(mask, x_random, x)


# ------------------------------- reference -----------------------------------

def sslnet_reference(x, x_corr, params, matmul_dtype=MATMUL_DTYPE):
    """Pure-JAX reference with the kernel's matmul-operand precision
    (matmul_dtype=float32 gives the exact f32 PyTorch training-mode math)."""
    def mm(a, b):
        return jnp.dot(a.astype(matmul_dtype), b.astype(matmul_dtype),
                       preferred_element_type=jnp.float32)

    def mlp_block(h, p):
        y = mm(h, p["w"].T) + p["b"]          # Linear bias kept: cancelled by BN anyway
        mean = jnp.mean(y, axis=0, keepdims=True)
        var = jnp.mean((y - mean) ** 2, axis=0, keepdims=True)
        y = p["gamma"] * (y - mean) / jnp.sqrt(var + BN_EPS) + p["beta"]
        return jnp.maximum(y, 0.0)

    def mlp(h, mp):
        for p in mp["blocks"]:
            h = mlp_block(h, p)
        return mm(h, mp["final"]["w"].T) + mp["final"]["b"]

    def attention(e, a):
        inv_scale = 1.0 / a["scale"]
        # 1/scale folded into wq/bq (mathematically == dividing the scores by scale),
        # matching the kernel's pack-time folding before the bf16 cast.
        q = mm(e, (a["wq"] * inv_scale).T) + a["bq"] * inv_scale
        k = mm(e, a["wk"].T) + a["bk"]
        v = mm(e, a["wv"].T) + a["bv"]
        w = jax.nn.softmax(mm(q, k.T), axis=-1)
        return mm(w, v)

    def branch(h):
        e = mlp(h, params["encoder"])
        e = e + attention(e, params["attn"])
        return mlp(e, params["head"])

    return branch(x), branch(x_corr)


# --------------------------------- main ---------------------------------------

if __name__ == "__main__":
    # TODO(synk): Dropout with p > 0 and BatchNorm running-stat updates are not
    # implemented (module defaults: dropout=0.0; forward-only port). self.cnn
    # (CNNBlock) is constructed by SSLNet but never used in forward().
    batch, input_dim, emb_dim = 8, 16, 32
    num_hidden, head_depth = 4, 2            # SSLNet defaults
    corruption_rate = 0.6

    key = jax.random.PRNGKey(0)
    k_x, k_p, k_c = jax.random.split(key, 3)
    x = jax.random.normal(k_x, (batch, input_dim), jnp.float32)
    features_low = jnp.min(x, axis=0) - 1.0
    features_high = jnp.max(x, axis=0) + 1.0

    params = init_params(k_p, input_dim, emb_dim, num_hidden, head_depth)
    x_corr = corrupt_input(k_c, x, features_low, features_high,
                           int(corruption_rate * input_dim))

    d_pad = _round_up(max(input_dim, emb_dim), 128)
    packed = pack_params(params, d_pad)

    out_clean, out_corr = sslnet_forward(
        x, x_corr, packed,
        n_enc_blocks=num_hidden - 1, n_head_blocks=head_depth - 1,
        emb_dim=emb_dim, d_pad=d_pad)
    out_clean, out_corr = jax.block_until_ready((out_clean, out_corr))

    ref_clean, ref_corr = sslnet_reference(x, x_corr, params)
    assert out_clean.shape == (batch, emb_dim)
    assert out_corr.shape == (batch, emb_dim)
    # Tolerance covers the EUP approximate reciprocal in the softmax plus bf16
    # quantization jitter of the attention weights (both ~1e-3 level at the output).
    assert jnp.allclose(out_clean, ref_clean, atol=1e-2, rtol=1e-2), "clean branch mismatch"
    assert jnp.allclose(out_corr, ref_corr, atol=1e-2, rtol=1e-2), "corrupted branch mismatch"

    print("KERNEL_OK")
</pallas_src>

<mosaic_0001>
module attributes {stable_mosaic.version = 11 : i64} {
  func.func @_sslnet_kernel(%arg0: memref<16x128xbf16, #tpu.memory_space<vmem>>, %arg1: memref<4x128x128xbf16, #tpu.memory_space<vmem>>, %arg2: memref<4x2x128xf32, #tpu.memory_space<vmem>>, %arg3: memref<2x128x128xbf16, #tpu.memory_space<vmem>>, %arg4: memref<2x128xf32, #tpu.memory_space<vmem>>, %arg5: memref<128x384xbf16, #tpu.memory_space<vmem>>, %arg6: memref<1x384xf32, #tpu.memory_space<vmem>>, %arg7: memref<2x8x128xf32, #tpu.memory_space<vmem>>) attributes {dimension_semantics = [], scalar_prefetch = 0 : i64, scratch_operands = 0 : i64, tpu.core_type = #tpu.core_type<tc>} {
    %c0 = arith.constant 0 : index
    %c0_0 = arith.constant 0 : index
    %0 = vector.load %arg0[%c0, %c0_0] : memref<16x128xbf16, #tpu.memory_space<vmem>>, vector<16x128xbf16>
    %c0_1 = arith.constant 0 : index
    %c0_2 = arith.constant 0 : index
    %c0_3 = arith.constant 0 : index
    %1 = vector.load %arg1[%c0_1, %c0_2, %c0_3] : memref<4x128x128xbf16, #tpu.memory_space<vmem>>, vector<1x128x128xbf16>
    %2 = vector.shape_cast %1 : vector<1x128x128xbf16> to vector<128x128xbf16>
    %cst = arith.constant dense<0.000000e+00> : vector<16x128xf32>
    %3 = tpu.matmul %0, %2, %cst {dimension_numbers = #tpu.dot_dimension_numbers<[1], [0], [0], [1], [0, 0, 1, 1], [], []>} : vector<16x128xbf16>, vector<128x128xbf16>, vector<16x128xf32> -> vector<16x128xf32>
    %4 = vector.shape_cast %3 : vector<16x128xf32> to vector<2x8x128xf32>
    %cst_4 = arith.constant dense<0.000000e+00> : vector<2x128xf32>
    %5 = vector.multi_reduction <add>, %4, %cst_4 [1] : vector<2x8x128xf32> to vector<2x128xf32>
    %6 = vector.shape_cast %5 : vector<2x128xf32> to vector<2x1x128xf32>
    %cst_5 = arith.constant 1.250000e-01 : f32
    %7 = vector.broadcast %cst_5 : f32 to vector<2x1x128xf32>
    %8 = arith.mulf %6, %7 : vector<2x1x128xf32>
    %9 = vector.broadcast %8 : vector<2x1x128xf32> to vector<2x8x128xf32>
    %10 = arith.subf %4, %9 : vector<2x8x128xf32>
    %11 = arith.mulf %10, %10 : vector<2x8x128xf32>
    %cst_6 = arith.constant dense<0.000000e+00> : vector<2x128xf32>
    %12 = vector.multi_reduction <add>, %11, %cst_6 [1] : vector<2x8x128xf32> to vector<2x128xf32>
    %13 = vector.shape_cast %12 : vector<2x128xf32> to vector<2x1x128xf32>
    %cst_7 = arith.constant 1.250000e-01 : f32
    %14 = vector.broadcast %cst_7 : f32 to vector<2x1x128xf32>
    %15 = arith.mulf %13, %14 : vector<2x1x128xf32>
    %c0_8 = arith.constant 0 : index
    %c0_9 = arith.constant 0 : index
    %c0_10 = arith.constant 0 : index
    %16 = vector.load %arg2[%c0_8, %c0_9, %c0_10] : memref<4x2x128xf32, #tpu.memory_space<vmem>>, vector<1x2x128xf32>
    %17 = vector.shape_cast %16 : vector<1x2x128xf32> to vector<2x128xf32>
    %18 = vector.extract_strided_slice %17 {offsets = [0, 0], sizes = [1, 128], strides = [1, 1]} : vector<2x128xf32> to vector<1x128xf32>
    %cst_11 = arith.constant 9.99999974E-6 : f32
    %19 = vector.broadcast %cst_11 : f32 to vector<2x1x128xf32>
    %20 = arith.addf %15, %19 : vector<2x1x128xf32>
    %21 = math.rsqrt %20 : vector<2x1x128xf32>
    %22 = vector.shape_cast %18 : vector<1x128xf32> to vector<1x1x128xf32>
    %23 = vector.broadcast %22 : vector<1x1x128xf32> to vector<2x1x128xf32>
    %24 = arith.mulf %23, %21 : vector<2x1x128xf32>
    %25 = vector.broadcast %24 : vector<2x1x128xf32> to vector<2x8x128xf32>
    %26 = arith.mulf %10, %25 : vector<2x8x128xf32>
    %27 = vector.extract_strided_slice %17 {offsets = [1, 0], sizes = [1, 128], strides = [1, 1]} : vector<2x128xf32> to vector<1x128xf32>
    %28 = vector.shape_cast %27 : vector<1x128xf32> to vector<1x1x128xf32>
    %29 = vector.broadcast %28 : vector<1x1x128xf32> to vector<2x8x128xf32>
    %30 = arith.addf %26, %29 : vector<2x8x128xf32>
    %cst_12 = arith.constant 0.000000e+00 : f32
    %31 = vector.broadcast %cst_12 : f32 to vector<2x8x128xf32>
    %32 = arith.maximumf %30, %31 : vector<2x8x128xf32>
    %33 = vector.shape_cast %32 : vector<2x8x128xf32> to vector<16x128xf32>
    %c1 = arith.constant 1 : index
    %c0_13 = arith.constant 0 : index
    %c0_14 = arith.constant 0 : index
    %34 = vector.load %arg1[%c1, %c0_13, %c0_14] : memref<4x128x128xbf16, #tpu.memory_space<vmem>>, vector<1x128x128xbf16>
    %35 = vector.shape_cast %34 : vector<1x128x128xbf16> to vector<128x128xbf16>
    %36 = arith.truncf %33 : vector<16x128xf32> to vector<16x128xbf16>
    %cst_15 = arith.constant dense<0.000000e+00> : vector<16x128xf32>
    %37 = tpu.matmul %36, %35, %cst_15 {dimension_numbers = #tpu.dot_dimension_numbers<[1], [0], [0], [1], [0, 0, 1, 1], [], []>} : vector<16x128xbf16>, vector<128x128xbf16>, vector<16x128xf32> -> vector<16x128xf32>
    %38 = vector.shape_cast %37 : vector<16x128xf32> to vector<2x8x128xf32>
    %cst_16 = arith.constant dense<0.000000e+00> : vector<2x128xf32>
    %39 = vector.multi_reduction <add>, %38, %cst_16 [1] : vector<2x8x128xf32> to vector<2x128xf32>
    %40 = vector.shape_cast %39 : vector<2x128xf32> to vector<2x1x128xf32>
    %cst_17 = arith.constant 1.250000e-01 : f32
    %41 = vector.broadcast %cst_17 : f32 to vector<2x1x128xf32>
    %42 = arith.mulf %40, %41 : vector<2x1x128xf32>
    %43 = vector.broadcast %42 : vector<2x1x128xf32> to vector<2x8x128xf32>
    %44 = arith.subf %38, %43 : vector<2x8x128xf32>
    %45 = arith.mulf %44, %44 : vector<2x8x128xf32>
    %cst_18 = arith.constant dense<0.000000e+00> : vector<2x128xf32>
    %46 = vector.multi_reduction <add>, %45, %cst_18 [1] : vector<2x8x128xf32> to vector<2x128xf32>
    %47 = vector.shape_cast %46 : vector<2x128xf32> to vector<2x1x128xf32>
    %cst_19 = arith.constant 1.250000e-01 : f32
    %48 = vector.broadcast %cst_19 : f32 to vector<2x1x128xf32>
    %49 = arith.mulf %47, %48 : vector<2x1x128xf32>
    %c1_20 = arith.constant 1 : index
    %c0_21 = arith.constant 0 : index
    %c0_22 = arith.constant 0 : index
    %50 = vector.load %arg2[%c1_20, %c0_21, %c0_22] : memref<4x2x128xf32, #tpu.memory_space<vmem>>, vector<1x2x128xf32>
    %51 = vector.shape_cast %50 : vector<1x2x128xf32> to vector<2x128xf32>
    %52 = vector.extract_strided_slice %51 {offsets = [0, 0], sizes = [1, 128], strides = [1, 1]} : vector<2x128xf32> to vector<1x128xf32>
    %cst_23 = arith.constant 9.99999974E-6 : f32
    %53 = vector.broadcast %cst_23 : f32 to vector<2x1x128xf32>
    %54 = arith.addf %49, %53 : vector<2x1x128xf32>
    %55 = math.rsqrt %54 : vector<2x1x128xf32>
    %56 = vector.shape_cast %52 : vector<1x128xf32> to vector<1x1x128xf32>
    %57 = vector.broadcast %56 : vector<1x1x128xf32> to vector<2x1x128xf32>
    %58 = arith.mulf %57, %55 : vector<2x1x128xf32>
    %59 = vector.broadcast %58 : vector<2x1x128xf32> to vector<2x8x128xf32>
    %60 = arith.mulf %44, %59 : vector<2x8x128xf32>
    %61 = vector.extract_strided_slice %51 {offsets = [1, 0], sizes = [1, 128], strides = [1, 1]} : vector<2x128xf32> to vector<1x128xf32>
    %62 = vector.shape_cast %61 : vector<1x128xf32> to vector<1x1x128xf32>
    %63 = vector.broadcast %62 : vector<1x1x128xf32> to vector<2x8x128xf32>
    %64 = arith.addf %60, %63 : vector<2x8x128xf32>
    %cst_24 = arith.constant 0.000000e+00 : f32
    %65 = vector.broadcast %cst_24 : f32 to vector<2x8x128xf32>
    %66 = arith.maximumf %64, %65 : vector<2x8x128xf32>
    %67 = vector.shape_cast %66 : vector<2x8x128xf32> to vector<16x128xf32>
    %c2 = arith.constant 2 : index
    %c0_25 = arith.constant 0 : index
    %c0_26 = arith.constant 0 : index
    %68 = vector.load %arg1[%c2, %c0_25, %c0_26] : memref<4x128x128xbf16, #tpu.memory_space<vmem>>, vector<1x128x128xbf16>
    %69 = vector.shape_cast %68 : vector<1x128x128xbf16> to vector<128x128xbf16>
    %70 = arith.truncf %67 : vector<16x128xf32> to vector<16x128xbf16>
    %cst_27 = arith.constant dense<0.000000e+00> : vector<16x128xf32>
    %71 = tpu.matmul %70, %69, %cst_27 {dimension_numbers = #tpu.dot_dimension_numbers<[1], [0], [0], [1], [0, 0, 1, 1], [], []>} : vector<16x128xbf16>, vector<128x128xbf16>, vector<16x128xf32> -> vector<16x128xf32>
    %72 = vector.shape_cast %71 : vector<16x128xf32> to vector<2x8x128xf32>
    %cst_28 = arith.constant dense<0.000000e+00> : vector<2x128xf32>
    %73 = vector.multi_reduction <add>, %72, %cst_28 [1] : vector<2x8x128xf32> to vector<2x128xf32>
    %74 = vector.shape_cast %73 : vector<2x128xf32> to vector<2x1x128xf32>
    %cst_29 = arith.constant 1.250000e-01 : f32
    %75 = vector.broadcast %cst_29 : f32 to vector<2x1x128xf32>
    %76 = arith.mulf %74, %75 : vector<2x1x128xf32>
    %77 = vector.broadcast %76 : vector<2x1x128xf32> to vector<2x8x128xf32>
    %78 = arith.subf %72, %77 : vector<2x8x128xf32>
    %79 = arith.mulf %78, %78 : vector<2x8x128xf32>
    %cst_30 = arith.constant dense<0.000000e+00> : vector<2x128xf32>
    %80 = vector.multi_reduction <add>, %79, %cst_30 [1] : vector<2x8x128xf32> to vector<2x128xf32>
    %81 = vector.shape_cast %80 : vector<2x128xf32> to vector<2x1x128xf32>
    %cst_31 = arith.constant 1.250000e-01 : f32
    %82 = vector.broadcast %cst_31 : f32 to vector<2x1x128xf32>
    %83 = arith.mulf %81, %82 : vector<2x1x128xf32>
    %c2_32 = arith.constant 2 : index
    %c0_33 = arith.constant 0 : index
    %c0_34 = arith.constant 0 : index
    %84 = vector.load %arg2[%c2_32, %c0_33, %c0_34] : memref<4x2x128xf32, #tpu.memory_space<vmem>>, vector<1x2x128xf32>
    %85 = vector.shape_cast %84 : vector<1x2x128xf32> to vector<2x128xf32>
    %86 = vector.extract_strided_slice %85 {offsets = [0, 0], sizes = [1, 128], strides = [1, 1]} : vector<2x128xf32> to vector<1x128xf32>
    %cst_35 = arith.constant 9.99999974E-6 : f32
    %87 = vector.broadcast %cst_35 : f32 to vector<2x1x128xf32>
    %88 = arith.addf %83, %87 : vector<2x1x128xf32>
    %89 = math.rsqrt %88 : vector<2x1x128xf32>
    %90 = vector.shape_cast %86 : vector<1x128xf32> to vector<1x1x128xf32>
    %91 = vector.broadcast %90 : vector<1x1x128xf32> to vector<2x1x128xf32>
    %92 = arith.mulf %91, %89 : vector<2x1x128xf32>
    %93 = vector.broadcast %92 : vector<2x1x128xf32> to vector<2x8x128xf32>
    %94 = arith.mulf %78, %93 : vector<2x8x128xf32>
    %95 = vector.extract_strided_slice %85 {offsets = [1, 0], sizes = [1, 128], strides = [1, 1]} : vector<2x128xf32> to vector<1x128xf32>
    %96 = vector.shape_cast %95 : vector<1x128xf32> to vector<1x1x128xf32>
    %97 = vector.broadcast %96 : vector<1x1x128xf32> to vector<2x8x128xf32>
    %98 = arith.addf %94, %97 : vector<2x8x128xf32>
    %cst_36 = arith.constant 0.000000e+00 : f32
    %99 = vector.broadcast %cst_36 : f32 to vector<2x8x128xf32>
    %100 = arith.maximumf %98, %99 : vector<2x8x128xf32>
    %101 = vector.shape_cast %100 : vector<2x8x128xf32> to vector<16x128xf32>
    %c0_37 = arith.constant 0 : index
    %c0_38 = arith.constant 0 : index
    %c0_39 = arith.constant 0 : index
    %102 = vector.load %arg3[%c0_37, %c0_38, %c0_39] : memref<2x128x128xbf16, #tpu.memory_space<vmem>>, vector<1x128x128xbf16>
    %103 = vector.shape_cast %102 : vector<1x128x128xbf16> to vector<128x128xbf16>
    %104 = arith.truncf %101 : vector<16x128xf32> to vector<16x128xbf16>
    %cst_40 = arith.constant dense<0.000000e+00> : vector<16x128xf32>
    %105 = tpu.matmul %104, %103, %cst_40 {dimension_numbers = #tpu.dot_dimension_numbers<[1], [0], [0], [1], [0, 0, 1, 1], [], []>} : vector<16x128xbf16>, vector<128x128xbf16>, vector<16x128xf32> -> vector<16x128xf32>
    %c0_41 = arith.constant 0 : index
    %c0_42 = arith.constant 0 : index
    %106 = vector.load %arg4[%c0_41, %c0_42] : memref<2x128xf32, #tpu.memory_space<vmem>>, vector<1x128xf32>
    %107 = vector.broadcast %106 : vector<1x128xf32> to vector<16x128xf32>
    %108 = arith.addf %105, %107 : vector<16x128xf32>
    %c0_43 = arith.constant 0 : index
    %c0_44 = arith.constant 0 : index
    %109 = vector.load %arg5[%c0_43, %c0_44] : memref<128x384xbf16, #tpu.memory_space<vmem>>, vector<128x384xbf16>
    %110 = arith.truncf %108 : vector<16x128xf32> to vector<16x128xbf16>
    %cst_45 = arith.constant dense<0.000000e+00> : vector<16x384xf32>
    %111 = tpu.matmul %110, %109, %cst_45 {dimension_numbers = #tpu.dot_dimension_numbers<[1], [0], [0], [1], [0, 0, 1, 1], [], []>} : vector<16x128xbf16>, vector<128x384xbf16>, vector<16x384xf32> -> vector<16x384xf32>
    %c0_46 = arith.constant 0 : index
    %c0_47 = arith.constant 0 : index
    %112 = vector.load %arg6[%c0_46, %c0_47] : memref<1x384xf32, #tpu.memory_space<vmem>>, vector<1x384xf32>
    %113 = vector.broadcast %112 : vector<1x384xf32> to vector<16x384xf32>
    %114 = arith.addf %111, %113 : vector<16x384xf32>
    %115 = vector.extract_strided_slice %114 {offsets = [0, 0], sizes = [16, 128], strides = [1, 1]} : vector<16x384xf32> to vector<16x128xf32>
    %116 = vector.shape_cast %115 : vector<16x128xf32> to vector<2x8x128xf32>
    %117 = vector.extract_strided_slice %114 {offsets = [0, 128], sizes = [16, 128], strides = [1, 1]} : vector<16x384xf32> to vector<16x128xf32>
    %118 = vector.shape_cast %117 : vector<16x128xf32> to vector<2x8x128xf32>
    %119 = vector.extract_strided_slice %114 {offsets = [0, 256], sizes = [16, 128], strides = [1, 1]} : vector<16x384xf32> to vector<16x128xf32>
    %120 = vector.shape_cast %119 : vector<16x128xf32> to vector<2x8x128xf32>
    %121 = arith.truncf %116 : vector<2x8x128xf32> to vector<2x8x128xbf16>
    %122 = arith.truncf %118 : vector<2x8x128xf32> to vector<2x8x128xbf16>
    "tpu.trace_start"() <{level = 10 : i32, message = "bqd,bkd->bqk"}> : () -> ()
    %cst_48 = arith.constant dense<0.000000e+00> : vector<2x8x8xf32>
    %123 = tpu.matmul %121, %122, %cst_48 {dimension_numbers = #tpu.dot_dimension_numbers<[2], [2], [1], [1], [0, 0, 0, 1, 1, 1], [0], [0]>} : vector<2x8x128xbf16>, vector<2x8x128xbf16>, vector<2x8x8xf32> -> vector<2x8x8xf32>
    "tpu.trace_stop"() : () -> ()
    %cst_49 = arith.constant dense<0xFF800000> : vector<2x8xf32>
    %124 = vector.multi_reduction <maximumf>, %123, %cst_49 [2] : vector<2x8x8xf32> to vector<2x8xf32>
    %125 = vector.shape_cast %124 : vector<2x8xf32> to vector<2x8x1xf32>
    %126 = vector.broadcast %125 : vector<2x8x1xf32> to vector<2x8x8xf32>
    %127 = arith.subf %123, %126 : vector<2x8x8xf32>
    %128 = math.exp %127 : vector<2x8x8xf32>
    %cst_50 = arith.constant dense<0.000000e+00> : vector<2x8xf32>
    %129 = vector.multi_reduction <add>, %128, %cst_50 [2] : vector<2x8x8xf32> to vector<2x8xf32>
    %130 = vector.shape_cast %129 : vector<2x8xf32> to vector<2x8x1xf32>
    %131 = tpu.reciprocal %130 {approx = true} : vector<2x8x1xf32> -> vector<2x8x1xf32>
    %132 = vector.broadcast %131 : vector<2x8x1xf32> to vector<2x8x8xf32>
    %133 = arith.mulf %128, %132 : vector<2x8x8xf32>
    %134 = arith.truncf %133 : vector<2x8x8xf32> to vector<2x8x8xbf16>
    %135 = arith.truncf %120 : vector<2x8x128xf32> to vector<2x8x128xbf16>
    "tpu.trace_start"() <{level = 10 : i32, message = "bqk,bkd->bqd"}> : () -> ()
    %cst_51 = arith.constant dense<0.000000e+00> : vector<2x8x128xf32>
    %136 = tpu.matmul %134, %135, %cst_51 {dimension_numbers = #tpu.dot_dimension_numbers<[2], [1], [1], [2], [0, 0, 0, 1, 1, 2], [0], [0]>} : vector<2x8x8xbf16>, vector<2x8x128xbf16>, vector<2x8x128xf32> -> vector<2x8x128xf32>
    "tpu.trace_stop"() : () -> ()
    %137 = vector.shape_cast %136 : vector<2x8x128xf32> to vector<16x128xf32>
    %138 = arith.addf %108, %137 : vector<16x128xf32>
    %c3 = arith.constant 3 : index
    %c0_52 = arith.constant 0 : index
    %c0_53 = arith.constant 0 : index
    %139 = vector.load %arg1[%c3, %c0_52, %c0_53] : memref<4x128x128xbf16, #tpu.memory_space<vmem>>, vector<1x128x128xbf16>
    %140 = vector.shape_cast %139 : vector<1x128x128xbf16> to vector<128x128xbf16>
    %141 = arith.truncf %138 : vector<16x128xf32> to vector<16x128xbf16>
    %cst_54 = arith.constant dense<0.000000e+00> : vector<16x128xf32>
    %142 = tpu.matmul %141, %140, %cst_54 {dimension_numbers = #tpu.dot_dimension_numbers<[1], [0], [0], [1], [0, 0, 1, 1], [], []>} : vector<16x128xbf16>, vector<128x128xbf16>, vector<16x128xf32> -> vector<16x128xf32>
    %143 = vector.shape_cast %142 : vector<16x128xf32> to vector<2x8x128xf32>
    %cst_55 = arith.constant dense<0.000000e+00> : vector<2x128xf32>
    %144 = vector.multi_reduction <add>, %143, %cst_55 [1] : vector<2x8x128xf32> to vector<2x128xf32>
    %145 = vector.shape_cast %144 : vector<2x128xf32> to vector<2x1x128xf32>
    %cst_56 = arith.constant 1.250000e-01 : f32
    %146 = vector.broadcast %cst_56 : f32 to vector<2x1x128xf32>
    %147 = arith.mulf %145, %146 : vector<2x1x128xf32>
    %148 = vector.broadcast %147 : vector<2x1x128xf32> to vector<2x8x128xf32>
    %149 = arith.subf %143, %148 : vector<2x8x128xf32>
    %150 = arith.mulf %149, %149 : vector<2x8x128xf32>
    %cst_57 = arith.constant dense<0.000000e+00> : vector<2x128xf32>
    %151 = vector.multi_reduction <add>, %150, %cst_57 [1] : vector<2x8x128xf32> to vector<2x128xf32>
    %152 = vector.shape_cast %151 : vector<2x128xf32> to vector<2x1x128xf32>
    %cst_58 = arith.constant 1.250000e-01 : f32
    %153 = vector.broadcast %cst_58 : f32 to vector<2x1x128xf32>
    %154 = arith.mulf %152, %153 : vector<2x1x128xf32>
    %c3_59 = arith.constant 3 : index
    %c0_60 = arith.constant 0 : index
    %c0_61 = arith.constant 0 : index
    %155 = vector.load %arg2[%c3_59, %c0_60, %c0_61] : memref<4x2x128xf32, #tpu.memory_space<vmem>>, vector<1x2x128xf32>
    %156 = vector.shape_cast %155 : vector<1x2x128xf32> to vector<2x128xf32>
    %157 = vector.extract_strided_slice %156 {offsets = [0, 0], sizes = [1, 128], strides = [1, 1]} : vector<2x128xf32> to vector<1x128xf32>
    %cst_62 = arith.constant 9.99999974E-6 : f32
    %158 = vector.broadcast %cst_62 : f32 to vector<2x1x128xf32>
    %159 = arith.addf %154, %158 : vector<2x1x128xf32>
    %160 = math.rsqrt %159 : vector<2x1x128xf32>
    %161 = vector.shape_cast %157 : vector<1x128xf32> to vector<1x1x128xf32>
    %162 = vector.broadcast %161 : vector<1x1x128xf32> to vector<2x1x128xf32>
    %163 = arith.mulf %162, %160 : vector<2x1x128xf32>
    %164 = vector.broadcast %163 : vector<2x1x128xf32> to vector<2x8x128xf32>
    %165 = arith.mulf %149, %164 : vector<2x8x128xf32>
    %166 = vector.extract_strided_slice %156 {offsets = [1, 0], sizes = [1, 128], strides = [1, 1]} : vector<2x128xf32> to vector<1x128xf32>
    %167 = vector.shape_cast %166 : vector<1x128xf32> to vector<1x1x128xf32>
    %168 = vector.broadcast %167 : vector<1x1x128xf32> to vector<2x8x128xf32>
    %169 = arith.addf %165, %168 : vector<2x8x128xf32>
    %cst_63 = arith.constant 0.000000e+00 : f32
    %170 = vector.broadcast %cst_63 : f32 to vector<2x8x128xf32>
    %171 = arith.maximumf %169, %170 : vector<2x8x128xf32>
    %172 = vector.shape_cast %171 : vector<2x8x128xf32> to vector<16x128xf32>
    %c1_64 = arith.constant 1 : index
    %c0_65 = arith.constant 0 : index
    %c0_66 = arith.constant 0 : index
    %173 = vector.load %arg3[%c1_64, %c0_65, %c0_66] : memref<2x128x128xbf16, #tpu.memory_space<vmem>>, vector<1x128x128xbf16>
    %174 = vector.shape_cast %173 : vector<1x128x128xbf16> to vector<128x128xbf16>
    %175 = arith.truncf %172 : vector<16x128xf32> to vector<16x128xbf16>
    %cst_67 = arith.constant dense<0.000000e+00> : vector<16x128xf32>
    %176 = tpu.matmul %175, %174, %cst_67 {dimension_numbers = #tpu.dot_dimension_numbers<[1], [0], [0], [1], [0, 0, 1, 1], [], []>} : vector<16x128xbf16>, vector<128x128xbf16>, vector<16x128xf32> -> vector<16x128xf32>
    %c1_68 = arith.constant 1 : index
    %c0_69 = arith.constant 0 : index
    %177 = vector.load %arg4[%c1_68, %c0_69] : memref<2x128xf32, #tpu.memory_space<vmem>>, vector<1x128xf32>
    %178 = vector.broadcast %177 : vector<1x128xf32> to vector<16x128xf32>
    %179 = arith.addf %176, %178 : vector<16x128xf32>
    %180 = vector.shape_cast %179 : vector<16x128xf32> to vector<2x8x128xf32>
    %c0_70 = arith.constant 0 : index
    %c0_71 = arith.constant 0 : index
    %c0_72 = arith.constant 0 : index
    %181 = vector.load %arg7[%c0_70, %c0_71, %c0_72] : memref<2x8x128xf32, #tpu.memory_space<vmem>>, vector<2x8x128xf32>
    tpu.vector_store %arg7[%c0_70, %c0_71, %c0_72], %180 {strides = array<i32>} : memref<2x8x128xf32, #tpu.memory_space<vmem>>, vector<2x8x128xf32>,
    return
  }
}

</mosaic_0001>

<llo_original>
// kernel: sslnet_forward.1
$region0: #{sslnet_forward.1}
  #allocation0 [shape = 'u32[]', space=smem, size = 0x4, offset = 0x4, fixed_abs, tag = 'smem constant byte address 0x4 - core index']
  #allocation1 [shape = 'u32[72,128]{1,0:T(1,128)}', space=vmem, size = 0x9000, scoped, tag = 'internal scratch']
  %s0 = inlined_call_operand.vmem [shape: bf16[16,128], index: 0, kind: input, shape index: {}]
  %s1 = inlined_call_operand.hbm [shape: bf16[4,128,128], index: 1, kind: input, shape index: {}]
  %s2 = inlined_call_operand.vmem [shape: f32[4,2,128], index: 2, kind: input, shape index: {}]
  %s3 = inlined_call_operand.hbm [shape: bf16[2,128,128], index: 3, kind: input, shape index: {}]
  %s4 = inlined_call_operand.vmem [shape: f32[2,128], index: 4, kind: input, shape index: {}]
  %s5 = inlined_call_operand.hbm [shape: bf16[128,384], index: 5, kind: input, shape index: {}]
  %s6 = inlined_call_operand.vmem [shape: f32[1,384], index: 6, kind: input, shape index: {}]
  %s7 = inlined_call_operand.vmem [shape: f32[2,8,128], index: 7, kind: output, shape index: {}]
  %s8 = sld [smem:[#allocation0]]
  $region50: #{sslnet_forward.1} parent=0
    _
  %s10 = ssub.s32 1, %s8
  %s11 = scalar_select 0, %s10, %s8
  $region1: #{sslnet_forward.1} parent=0
    #allocation2 [shape = 'u8[131072]{0}', space=vmem, size = 0x20000, scoped, tag = 'input window, operand 1, single buffered']
    #allocation3 [shape = 's32[1]{0}', space=sflag, size = 0x4, scoped, tag = 'scoped memory for sslnet_forward.1']
    #allocation4 [shape = 'u8[65536]{0}', space=vmem, size = 0x10000, scoped, tag = 'input window, operand 3, single buffered']
    #allocation5 [shape = 's32[1]{0}', space=sflag, size = 0x4, scoped, tag = 'scoped memory for sslnet_forward.1']
    #allocation6 [shape = 'u8[98304]{0}', space=vmem, size = 0x18000, scoped, tag = 'input window, operand 5, single buffered']
    %12 = vsyncpa [#allocation3], 0
    %13 = vsyncpa [#allocation5], 0
    // Predicated region
    $region2: #{sslnet_forward.1} parent=1 // pred_check
      _
    $region3: #{sslnet_forward.1} parent=1 // pred_check_branch
      %15 = sbr.rel (0) target = $region5
    $region4: #{sslnet_forward.1} parent=1 // pred_region
      _
    $region5: #{sslnet_forward.1} parent=1 // pred_fallthru
      _
    // Predicated region
    $region6: #{sslnet_forward.1} parent=1 // pred_check
      _
    $region7: #{sslnet_forward.1} parent=1 // pred_check_branch
      %17 = sbr.rel (0) target = $region9
    $region8: #{sslnet_forward.1} parent=1 // pred_region
      %19 = vsyncadd [#allocation3], 0
      %s20 = sshll.u32 %s1, 4
      %s21 = int_to_ptr.hbm [resolvable:$true] %s20
      %s22 = sshll.u32 [#allocation2], 4
      %s23 = int_to_ptr.vmem [resolvable:$true] %s22
      %28 = dma.hbm_to_vmem [thread:$0]  %s21, 4096, %s23, [#allocation3], 64, 64, 4
    $region9: #{sslnet_forward.1} parent=1 // pred_fallthru
      _
    // Predicated region
    $region10: #{sslnet_forward.1} parent=1 // pred_check
      _
    $region11: #{sslnet_forward.1} parent=1 // pred_check_branch
      %30 = sbr.rel (0) target = $region13
    $region12: #{sslnet_forward.1} parent=1 // pred_region
      _
    $region13: #{sslnet_forward.1} parent=1 // pred_fallthru
      _
    // Predicated region
    $region14: #{sslnet_forward.1} parent=1 // pred_check
      _
    $region15: #{sslnet_forward.1} parent=1 // pred_check_branch
      %32 = sbr.rel (0) target = $region17
    $region16: #{sslnet_forward.1} parent=1 // pred_region
      %34 = vsyncadd [#allocation5], 0
      %s35 = sshll.u32 %s3, 4
      %s36 = int_to_ptr.hbm [resolvable:$true] %s35
      %s37 = sshll.u32 [#allocation4], 4
      %s38 = int_to_ptr.vmem [resolvable:$true] %s37
      %43 = dma.hbm_to_vmem [thread:$0]  %s36, 2048, %s38, [#allocation5], 64, 64, 4
    $region17: #{sslnet_forward.1} parent=1 // pred_fallthru
      _
    // Predicated region
    $region18: #{sslnet_forward.1} parent=1 // pred_check
      _
    $region19: #{sslnet_forward.1} parent=1 // pred_check_branch
      %45 = sbr.rel (0) target = $region21
    $region20: #{sslnet_forward.1} parent=1 // pred_region
      _
    $region21: #{sslnet_forward.1} parent=1 // pred_fallthru
      _
    // Predicated region
    $region22: #{sslnet_forward.1} parent=1 // pred_check
      _
    $region23: #{sslnet_forward.1} parent=1 // pred_check_branch
      %47 = sbr.rel (0) target = $region25
    $region24: #{sslnet_forward.1} parent=1 // pred_region
      %49 = vsyncadd [#allocation5], 0
      %s50 = sshll.u32 %s5, 4
      %s51 = int_to_ptr.hbm [resolvable:$true] %s50
      %s52 = sshll.u32 [#allocation6], 4
      %s53 = int_to_ptr.vmem [resolvable:$true] %s52
      %58 = dma.hbm_to_vmem [thread:$0]  %s51, 3072, %s53, [#allocation5], 192, 192, 12
    $region25: #{sslnet_forward.1} parent=1 // pred_fallthru
      _
    // Predicated region
    $region26: #{sslnet_forward.1} parent=1 // pred_check
      _
    $region27: #{sslnet_forward.1} parent=1 // pred_check_branch
      %60 = sbr.rel (0) target = $region29
    $region28: #{sslnet_forward.1} parent=1 // pred_region
      _
    $region29: #{sslnet_forward.1} parent=1 // pred_fallthru
      _
    // Predicated region
    $region30: #{sslnet_forward.1} parent=1 // pred_check
      _
    $region31: #{sslnet_forward.1} parent=1 // pred_check_branch
      %62 = sbr.rel (0) target = $region33
    $region32: #{sslnet_forward.1} parent=1 // pred_region
      %64 = dma.done [#allocation3], 4096
    $region33: #{sslnet_forward.1} parent=1 // pred_fallthru
      _
    // Predicated region
    $region34: #{sslnet_forward.1} parent=1 // pred_check
      _
    $region35: #{sslnet_forward.1} parent=1 // pred_check_branch
      %66 = sbr.rel (0) target = $region37
    $region36: #{sslnet_forward.1} parent=1 // pred_region
      %68 = dma.done [#allocation5], 2048
    $region37: #{sslnet_forward.1} parent=1 // pred_fallthru
      _
    // Predicated region
    $region38: #{sslnet_forward.1} parent=1 // pred_check
      _
    $region39: #{sslnet_forward.1} parent=1 // pred_check_branch
      %70 = sbr.rel (0) target = $region41
    $region40: #{sslnet_forward.1} parent=1 // pred_region
      %72 = dma.done [#allocation5], 3072
    $region41: #{sslnet_forward.1} parent=1 // pred_fallthru
      _
    %v74 = vld [vmem:[%s0] sm:$0xf]
    %v75 = vld [vmem:[%s0 + $0x4] sm:$0xf]
    %v76 = vld [vmem:[#allocation2] sm:$0xf]
    %v77 = vld [vmem:[#allocation2 + $0x4] sm:$0xf]
    %v78 = vld [vmem:[#allocation2 + $0x8] sm:$0xf]
    %v79 = vld [vmem:[#allocation2 + $0xc] sm:$0xf]
    %v80 = vld [vmem:[#allocation2 + $0x10] sm:$0xf]
    %v81 = vld [vmem:[#allocation2 + $0x14] sm:$0xf]
    %v82 = vld [vmem:[#allocation2 + $0x18] sm:$0xf]
    %v83 = vld [vmem:[#allocation2 + $0x1c] sm:$0xf]
    %v84 = vld [vmem:[#allocation2 + $0x20] sm:$0xf]
    %v85 = vld [vmem:[#allocation2 + $0x24] sm:$0xf]
    %v86 = vld [vmem:[#allocation2 + $0x28] sm:$0xf]
    %v87 = vld [vmem:[#allocation2 + $0x2c] sm:$0xf]
    %v88 = vld [vmem:[#allocation2 + $0x30] sm:$0xf]
    %v89 = vld [vmem:[#allocation2 + $0x34] sm:$0xf]
    %v90 = vld [vmem:[#allocation2 + $0x38] sm:$0xf]
    %v91 = vld [vmem:[#allocation2 + $0x3c] sm:$0xf]
    %v94 = vunpack.c.l.b16 %v74
    %v95 = vunpack.c.l.b16 %v75
    %v96 = vpack.c.b16 %v95, %v94
    %v114 = vunpack.c.l.b16 %v76
    %v115 = vunpack.c.l.b16 %v77
    %v116 = vunpack.c.l.b16 %v78
    %v117 = vunpack.c.l.b16 %v79
    %v118 = vunpack.c.l.b16 %v80
    %v119 = vunpack.c.l.b16 %v81
    %v120 = vunpack.c.l.b16 %v82
    %v121 = vunpack.c.l.b16 %v83
    %v122 = vunpack.c.l.b16 %v84
    %v123 = vunpack.c.l.b16 %v85
    %v124 = vunpack.c.l.b16 %v86
    %v125 = vunpack.c.l.b16 %v87
    %v126 = vunpack.c.l.b16 %v88
    %v127 = vunpack.c.l.b16 %v89
    %v128 = vunpack.c.l.b16 %v90
    %v129 = vunpack.c.l.b16 %v91
    %v130 = vpack.c.b16 %v115, %v114
    %v131 = vpack.c.b16 %v117, %v116
    %v132 = vpack.c.b16 %v119, %v118
    %v133 = vpack.c.b16 %v121, %v120
    %v134 = vpack.c.b16 %v123, %v122
    %v135 = vpack.c.b16 %v125, %v124
    %v136 = vpack.c.b16 %v127, %v126
    %v137 = vpack.c.b16 %v129, %v128
    %146 = vmatpush.bf16.msra.mxu0 %v137
    %147 = vmatpush.bf16.msra.mxu0 %v136
    %148 = vmatpush.bf16.msra.mxu0 %v135
    %149 = vmatpush.bf16.msra.mxu0 %v134
    %150 = vmatpush.bf16.msra.mxu0 %v133
    %151 = vmatpush.bf16.msra.mxu0 %v132
    %152 = vmatpush.bf16.msra.mxu0 %v131
    %153 = vmatpush.bf16.msra.mxu0 %v130
    %154 = vmatmul.bf16.gmra.mxu0 %v96
    %v155 = vpop.f32.mrf.mxu0
    %v156 = vadd.f32 0.0, %v155
    %v157 = vpop.f32.mrf.mxu0
    %v158 = vadd.f32 0.0, %v157
    %159 = vdwg.mxu0
    %v160 = vrot.slane %v156, 4
    %v161 = vadd.f32 %v156, %v160
    %v162 = vrot.slane %v161, 2
    %v163 = vadd.f32 %v161, %v162
    %v164 = vrot.slane %v163, 1
    %v165 = vadd.f32 %v163, %v164
    %v166 = vrot.slane %v158, 4
    %v167 = vadd.f32 %v158, %v166
    %v168 = vrot.slane %v167, 2
    %v169 = vadd.f32 %v167, %v168
    %v170 = vrot.slane %v169, 1
    %v171 = vadd.f32 %v169, %v170
    %v172 = vmul.f32 %v165, 0.125
    %v173 = vmul.f32 %v171, 0.125
    %v174 = vsub.f32 %v156, %v172
    %v175 = vsub.f32 %v158, %v173
    %v176 = vmul.f32 %v174, %v174
    %v177 = vmul.f32 %v175, %v175
    %v178 = vrot.slane %v176, 4
    %v179 = vadd.f32 %v176, %v178
    %v180 = vrot.slane %v179, 2
    %v181 = vadd.f32 %v179, %v180
    %v182 = vrot.slane %v181, 1
    %v183 = vadd.f32 %v181, %v182
    %v184 = vrot.slane %v177, 4
    %v185 = vadd.f32 %v177, %v184
    %v186 = vrot.slane %v185, 2
    %v187 = vadd.f32 %v185, %v186
    %v188 = vrot.slane %v187, 1
    %v189 = vadd.f32 %v187, %v188
    %v190 = vmul.f32 %v183, 0.125
    %v191 = vmul.f32 %v189, 0.125
    %v192 = vld [vmem:[%s2] sm:$0x3]
    %v193 = vadd.f32 %v190, 1e-05
    %v194 = vadd.f32 %v191, 1e-05
    %v195 = vrsqrt.pop %v193
    %v196 = vmul.f32 %v195, %v193
    %v197 = vmul.f32 %v196, %v195
    %v198 = vmul.f32 0.5, %v197
    %v199 = vsub.f32 1.5, %v198
    %v200 = vmul.f32 %v195, %v199
    %vm201 = vweird.f32 %v193
    %vm202 = vweird.f32 %v195
    %vm203 = vmor %vm201, %vm202
    %v204 = vsel %vm203, %v195, %v200
    %v205 = vrsqrt.pop %v194
    %v206 = vmul.f32 %v205, %v194
    %v207 = vmul.f32 %v206, %v205
    %v208 = vmul.f32 0.5, %v207
    %v209 = vsub.f32 1.5, %v208
    %v210 = vmul.f32 %v205, %v209
    %vm211 = vweird.f32 %v194
    %vm212 = vweird.f32 %v205
    %vm213 = vmor %vm211, %vm212
    %v214 = vsel %vm213, %v205, %v210
    %v215 = vmul.f32 %v192, %v204
    %v216 = vmul.f32 %v192, %v214
    %v217 = vperm.slane %v215, 0
    %v218 = vperm.slane %v216, 0
    %v219 = vmul.f32 %v174, %v217
    %v220 = vmul.f32 %v175, %v218
    %v221 = vperm.slane %v192, 1
    %v222 = vadd.f32 %v219, %v221
    %v223 = vadd.f32 %v220, %v221
    %v224 = vmax.f32 %v222, 0.0
    %v225 = vmax.f32 %v223, 0.0
    %s226 = scalar_lea.vmem [#allocation2], 64
    %v227 = vld [vmem:[%s226] sm:$0xf]
    %v228 = vld [vmem:[%s226 + $0x4] sm:$0xf]
    %v229 = vld [vmem:[%s226 + $0x8] sm:$0xf]
    %v230 = vld [vmem:[%s226 + $0xc] sm:$0xf]
    %v231 = vld [vmem:[%s226 + $0x10] sm:$0xf]
    %v232 = vld [vmem:[%s226 + $0x14] sm:$0xf]
    %v233 = vld [vmem:[%s226 + $0x18] sm:$0xf]
    %v234 = vld [vmem:[%s226 + $0x1c] sm:$0xf]
    %v235 = vld [vmem:[%s226 + $0x20] sm:$0xf]
    %v236 = vld [vmem:[%s226 + $0x24] sm:$0xf]
    %v237 = vld [vmem:[%s226 + $0x28] sm:$0xf]
    %v238 = vld [vmem:[%s226 + $0x2c] sm:$0xf]
    %v239 = vld [vmem:[%s226 + $0x30] sm:$0xf]
    %v240 = vld [vmem:[%s226 + $0x34] sm:$0xf]
    %v241 = vld [vmem:[%s226 + $0x38] sm:$0xf]
    %v242 = vld [vmem:[%s226 + $0x3c] sm:$0xf]
    %v243 = vpack.c.bf16 %v225, %v224
    %v260 = vunpack.c.l.b16 %v227
    %v261 = vunpack.c.l.b16 %v228
    %v262 = vunpack.c.l.b16 %v229
    %v263 = vunpack.c.l.b16 %v230
    %v264 = vunpack.c.l.b16 %v231
    %v265 = vunpack.c.l.b16 %v232
    %v266 = vunpack.c.l.b16 %v233
    %v267 = vunpack.c.l.b16 %v234
    %v268 = vunpack.c.l.b16 %v235
    %v269 = vunpack.c.l.b16 %v236
    %v270 = vunpack.c.l.b16 %v237
    %v271 = vunpack.c.l.b16 %v238
    %v272 = vunpack.c.l.b16 %v239
    %v273 = vunpack.c.l.b16 %v240
    %v274 = vunpack.c.l.b16 %v241
    %v275 = vunpack.c.l.b16 %v242
    %v276 = vpack.c.b16 %v261, %v260
    %v277 = vpack.c.b16 %v263, %v262
    %v278 = vpack.c.b16 %v265, %v264
    %v279 = vpack.c.b16 %v267, %v266
    %v280 = vpack.c.b16 %v269, %v268
    %v281 = vpack.c.b16 %v271, %v270
    %v282 = vpack.c.b16 %v273, %v272
    %v283 = vpack.c.b16 %v275, %v274
    %292 = vmatpush.bf16.msra.mxu0 %v283
    %293 = vmatpush.bf16.msra.mxu0 %v282
    %294 = vmatpush.bf16.msra.mxu0 %v281
    %295 = vmatpush.bf16.msra.mxu0 %v280
    %296 = vmatpush.bf16.msra.mxu0 %v279
    %297 = vmatpush.bf16.msra.mxu0 %v278
    %298 = vmatpush.bf16.msra.mxu0 %v277
    %299 = vmatpush.bf16.msra.mxu0 %v276
    %300 = vmatmul.bf16.gmra.mxu0 %v243
    %v301 = vpop.f32.mrf.mxu0
    %v302 = vadd.f32 0.0, %v301
    %v303 = vpop.f32.mrf.mxu0
    %v304 = vadd.f32 0.0, %v303
    %305 = vdwg.mxu0
    %v306 = vrot.slane %v302, 4
    %v307 = vadd.f32 %v302, %v306
    %v308 = vrot.slane %v307, 2
    %v309 = vadd.f32 %v307, %v308
    %v310 = vrot.slane %v309, 1
    %v311 = vadd.f32 %v309, %v310
    %v312 = vrot.slane %v304, 4
    %v313 = vadd.f32 %v304, %v312
    %v314 = vrot.slane %v313, 2
    %v315 = vadd.f32 %v313, %v314
    %v316 = vrot.slane %v315, 1
    %v317 = vadd.f32 %v315, %v316
    %v318 = vmul.f32 %v311, 0.125
    %v319 = vmul.f32 %v317, 0.125
    %v320 = vsub.f32 %v302, %v318
    %v321 = vsub.f32 %v304, %v319
    %v322 = vmul.f32 %v320, %v320
    %v323 = vmul.f32 %v321, %v321
    %v324 = vrot.slane %v322, 4
    %v325 = vadd.f32 %v322, %v324
    %v326 = vrot.slane %v325, 2
    %v327 = vadd.f32 %v325, %v326
    %v328 = vrot.slane %v327, 1
    %v329 = vadd.f32 %v327, %v328
    %v330 = vrot.slane %v323, 4
    %v331 = vadd.f32 %v323, %v330
    %v332 = vrot.slane %v331, 2
    %v333 = vadd.f32 %v331, %v332
    %v334 = vrot.slane %v333, 1
    %v335 = vadd.f32 %v333, %v334
    %v336 = vmul.f32 %v329, 0.125
    %v337 = vmul.f32 %v335, 0.125
    %s338 = scalar_lea.vmem %s2, 2
    %v339 = vld [vmem:[%s338] sm:$0x3]
    %v340 = vadd.f32 %v336, 1e-05
    %v341 = vadd.f32 %v337, 1e-05
    %v342 = vrsqrt.pop %v340
    %v343 = vmul.f32 %v342, %v340
    %v344 = vmul.f32 %v343, %v342
    %v345 = vmul.f32 0.5, %v344
    %v346 = vsub.f32 1.5, %v345
    %v347 = vmul.f32 %v342, %v346
    %vm348 = vweird.f32 %v340
    %vm349 = vweird.f32 %v342
    %vm350 = vmor %vm348, %vm349
    %v351 = vsel %vm350, %v342, %v347
    %v352 = vrsqrt.pop %v341
    %v353 = vmul.f32 %v352, %v341
    %v354 = vmul.f32 %v353, %v352
    %v355 = vmul.f32 0.5, %v354
    %v356 = vsub.f32 1.5, %v355
    %v357 = vmul.f32 %v352, %v356
    %vm358 = vweird.f32 %v341
    %vm359 = vweird.f32 %v352
    %vm360 = vmor %vm358, %vm359
    %v361 = vsel %vm360, %v352, %v357
    %v362 = vmul.f32 %v339, %v351
    %v363 = vmul.f32 %v339, %v361
    %v364 = vperm.slane %v362, 0
    %v365 = vperm.slane %v363, 0
    %v366 = vmul.f32 %v320, %v364
    %v367 = vmul.f32 %v321, %v365
    %v368 = vperm.slane %v339, 1
    %v369 = vadd.f32 %v366, %v368
    %v370 = vadd.f32 %v367, %v368
    %v371 = vmax.f32 %v369, 0.0
    %v372 = vmax.f32 %v370, 0.0
    %s373 = scalar_lea.vmem [#allocation2], 128
    %v374 = vld [vmem:[%s373] sm:$0xf]
    %v375 = vld [vmem:[%s373 + $0x4] sm:$0xf]
    %v376 = vld [vmem:[%s373 + $0x8] sm:$0xf]
    %v377 = vld [vmem:[%s373 + $0xc] sm:$0xf]
    %v378 = vld [vmem:[%s373 + $0x10] sm:$0xf]
    %v379 = vld [vmem:[%s373 + $0x14] sm:$0xf]
    %v380 = vld [vmem:[%s373 + $0x18] sm:$0xf]
    %v381 = vld [vmem:[%s373 + $0x1c] sm:$0xf]
    %v382 = vld [vmem:[%s373 + $0x20] sm:$0xf]
    %v383 = vld [vmem:[%s373 + $0x24] sm:$0xf]
    %v384 = vld [vmem:[%s373 + $0x28] sm:$0xf]
    %v385 = vld [vmem:[%s373 + $0x2c] sm:$0xf]
    %v386 = vld [vmem:[%s373 + $0x30] sm:$0xf]
    %v387 = vld [vmem:[%s373 + $0x34] sm:$0xf]
    %v388 = vld [vmem:[%s373 + $0x38] sm:$0xf]
    %v389 = vld [vmem:[%s373 + $0x3c] sm:$0xf]
    %v390 = vpack.c.bf16 %v372, %v371
    %v407 = vunpack.c.l.b16 %v374
    %v408 = vunpack.c.l.b16 %v375
    %v409 = vunpack.c.l.b16 %v376
    %v410 = vunpack.c.l.b16 %v377
    %v411 = vunpack.c.l.b16 %v378
    %v412 = vunpack.c.l.b16 %v379
    %v413 = vunpack.c.l.b16 %v380
    %v414 = vunpack.c.l.b16 %v381
    %v415 = vunpack.c.l.b16 %v382
    %v416 = vunpack.c.l.b16 %v383
    %v417 = vunpack.c.l.b16 %v384
    %v418 = vunpack.c.l.b16 %v385
    %v419 = vunpack.c.l.b16 %v386
    %v420 = vunpack.c.l.b16 %v387
    %v421 = vunpack.c.l.b16 %v388
    %v422 = vunpack.c.l.b16 %v389
    %v423 = vpack.c.b16 %v408, %v407
    %v424 = vpack.c.b16 %v410, %v409
    %v425 = vpack.c.b16 %v412, %v411
    %v426 = vpack.c.b16 %v414, %v413
    %v427 = vpack.c.b16 %v416, %v415
    %v428 = vpack.c.b16 %v418, %v417
    %v429 = vpack.c.b16 %v420, %v419
    %v430 = vpack.c.b16 %v422, %v421
    %439 = vmatpush.bf16.msra.mxu0 %v430
    %440 = vmatpush.bf16.msra.mxu0 %v429
    %441 = vmatpush.bf16.msra.mxu0 %v428
    %442 = vmatpush.bf16.msra.mxu0 %v427
    %443 = vmatpush.bf16.msra.mxu0 %v426
    %444 = vmatpush.bf16.msra.mxu0 %v425
    %445 = vmatpush.bf16.msra.mxu0 %v424
    %446 = vmatpush.bf16.msra.mxu0 %v423
    %447 = vmatmul.bf16.gmra.mxu0 %v390
    %v448 = vpop.f32.mrf.mxu0
    %v449 = vadd.f32 0.0, %v448
    %v450 = vpop.f32.mrf.mxu0
    %v451 = vadd.f32 0.0, %v450
    %452 = vdwg.mxu0
    %v453 = vrot.slane %v449, 4
    %v454 = vadd.f32 %v449, %v453
    %v455 = vrot.slane %v454, 2
    %v456 = vadd.f32 %v454, %v455
    %v457 = vrot.slane %v456, 1
    %v458 = vadd.f32 %v456, %v457
    %v459 = vrot.slane %v451, 4
    %v460 = vadd.f32 %v451, %v459
    %v461 = vrot.slane %v460, 2
    %v462 = vadd.f32 %v460, %v461
    %v463 = vrot.slane %v462, 1
    %v464 = vadd.f32 %v462, %v463
    %v465 = vmul.f32 %v458, 0.125
    %v466 = vmul.f32 %v464, 0.125
    %v467 = vsub.f32 %v449, %v465
    %v468 = vsub.f32 %v451, %v466
    %v469 = vmul.f32 %v467, %v467
    %v470 = vmul.f32 %v468, %v468
    %v471 = vrot.slane %v469, 4
    %v472 = vadd.f32 %v469, %v471
    %v473 = vrot.slane %v472, 2
    %v474 = vadd.f32 %v472, %v473
    %v475 = vrot.slane %v474, 1
    %v476 = vadd.f32 %v474, %v475
    %v477 = vrot.slane %v470, 4
    %v478 = vadd.f32 %v470, %v477
    %v479 = vrot.slane %v478, 2
    %v480 = vadd.f32 %v478, %v479
    %v481 = vrot.slane %v480, 1
    %v482 = vadd.f32 %v480, %v481
    %v483 = vmul.f32 %v476, 0.125
    %v484 = vmul.f32 %v482, 0.125
    %s485 = scalar_lea.vmem %s2, 4
    %v486 = vld [vmem:[%s485] sm:$0x3]
    %v487 = vadd.f32 %v483, 1e-05
    %v488 = vadd.f32 %v484, 1e-05
    %v489 = vrsqrt.pop %v487
    %v490 = vmul.f32 %v489, %v487
    %v491 = vmul.f32 %v490, %v489
    %v492 = vmul.f32 0.5, %v491
    %v493 = vsub.f32 1.5, %v492
    %v494 = vmul.f32 %v489, %v493
    %vm495 = vweird.f32 %v487
    %vm496 = vweird.f32 %v489
    %vm497 = vmor %vm495, %vm496
    %v498 = vsel %vm497, %v489, %v494
    %v499 = vrsqrt.pop %v488
    %v500 = vmul.f32 %v499, %v488
    %v501 = vmul.f32 %v500, %v499
    %v502 = vmul.f32 0.5, %v501
    %v503 = vsub.f32 1.5, %v502
    %v504 = vmul.f32 %v499, %v503
    %vm505 = vweird.f32 %v488
    %vm506 = vweird.f32 %v499
    %vm507 = vmor %vm505, %vm506
    %v508 = vsel %vm507, %v499, %v504
    %v509 = vmul.f32 %v486, %v498
    %v510 = vmul.f32 %v486, %v508
    %v511 = vperm.slane %v509, 0
    %v512 = vperm.slane %v510, 0
    %v513 = vmul.f32 %v467, %v511
    %v514 = vmul.f32 %v468, %v512
    %v515 = vperm.slane %v486, 1
    %v516 = vadd.f32 %v513, %v515
    %v517 = vadd.f32 %v514, %v515
    %v518 = vmax.f32 %v516, 0.0
    %v519 = vmax.f32 %v517, 0.0
    %v520 = vld [vmem:[#allocation4] sm:$0xf]
    %v521 = vld [vmem:[#allocation4 + $0x4] sm:$0xf]
    %v522 = vld [vmem:[#allocation4 + $0x8] sm:$0xf]
    %v523 = vld [vmem:[#allocation4 + $0xc] sm:$0xf]
    %v524 = vld [vmem:[#allocation4 + $0x10] sm:$0xf]
    %v525 = vld [vmem:[#allocation4 + $0x14] sm:$0xf]
    %v526 = vld [vmem:[#allocation4 + $0x18] sm:$0xf]
    %v527 = vld [vmem:[#allocation4 + $0x1c] sm:$0xf]
    %v528 = vld [vmem:[#allocation4 + $0x20] sm:$0xf]
    %v529 = vld [vmem:[#allocation4 + $0x24] sm:$0xf]
    %v530 = vld [vmem:[#allocation4 + $0x28] sm:$0xf]
    %v531 = vld [vmem:[#allocation4 + $0x2c] sm:$0xf]
    %v532 = vld [vmem:[#allocation4 + $0x30] sm:$0xf]
    %v533 = vld [vmem:[#allocation4 + $0x34] sm:$0xf]
    %v534 = vld [vmem:[#allocation4 + $0x38] sm:$0xf]
    %v535 = vld [vmem:[#allocation4 + $0x3c] sm:$0xf]
    %v536 = vpack.c.bf16 %v519, %v518
    %v537 = vld [vmem:[%s4] sm:$0x1]
    %v538 = vperm.slane %v537, 0
    %v555 = vunpack.c.l.b16 %v520
    %v556 = vunpack.c.l.b16 %v521
    %v557 = vunpack.c.l.b16 %v522
    %v558 = vunpack.c.l.b16 %v523
    %v559 = vunpack.c.l.b16 %v524
    %v560 = vunpack.c.l.b16 %v525
    %v561 = vunpack.c.l.b16 %v526
    %v562 = vunpack.c.l.b16 %v527
    %v563 = vunpack.c.l.b16 %v528
    %v564 = vunpack.c.l.b16 %v529
    %v565 = vunpack.c.l.b16 %v530
    %v566 = vunpack.c.l.b16 %v531
    %v567 = vunpack.c.l.b16 %v532
    %v568 = vunpack.c.l.b16 %v533
    %v569 = vunpack.c.l.b16 %v534
    %v570 = vunpack.c.l.b16 %v535
    %v571 = vpack.c.b16 %v556, %v555
    %v572 = vpack.c.b16 %v558, %v557
    %v573 = vpack.c.b16 %v560, %v559
    %v574 = vpack.c.b16 %v562, %v561
    %v575 = vpack.c.b16 %v564, %v563
    %v576 = vpack.c.b16 %v566, %v565
    %v577 = vpack.c.b16 %v568, %v567
    %v578 = vpack.c.b16 %v570, %v569
    %587 = vmatpush.bf16.msra.mxu0 %v578
    %588 = vmatpush.bf16.msra.mxu0 %v577
    %589 = vmatpush.bf16.msra.mxu0 %v576
    %590 = vmatpush.bf16.msra.mxu0 %v575
    %591 = vmatpush.bf16.msra.mxu0 %v574
    %592 = vmatpush.bf16.msra.mxu0 %v573
    %593 = vmatpush.bf16.msra.mxu0 %v572
    %594 = vmatpush.bf16.msra.mxu0 %v571
    %595 = vmatmul.bf16.gmra.mxu0 %v536
    %v596 = vpop.f32.mrf.mxu0
    %v597 = vadd.f32 %v538, %v596
    %v598 = vpop.f32.mrf.mxu0
    %v599 = vadd.f32 %v538, %v598
    %600 = vdwg.mxu0
    %v601 = vld [vmem:[#allocation6] sm:$0xff]
    %v602 = vld [vmem:[#allocation6 + $0x8] sm:$0xf]
    %v603 = vld [vmem:[#allocation6 + $0xc] sm:$0xff]
    %v604 = vld [vmem:[#allocation6 + $0x14] sm:$0xf]
    %v605 = vld [vmem:[#allocation6 + $0x18] sm:$0xff]
    %v606 = vld [vmem:[#allocation6 + $0x20] sm:$0xf]
    %v607 = vld [vmem:[#allocation6 + $0x24] sm:$0xff]
    %v608 = vld [vmem:[#allocation6 + $0x2c] sm:$0xf]
    %v609 = vld [vmem:[#allocation6 + $0x30] sm:$0xff]
    %v610 = vld [vmem:[#allocation6 + $0x38] sm:$0xf]
    %v611 = vld [vmem:[#allocation6 + $0x3c] sm:$0xff]
    %v612 = vld [vmem:[#allocation6 + $0x44] sm:$0xf]
    %v613 = vld [vmem:[#allocation6 + $0x48] sm:$0xff]
    %v614 = vld [vmem:[#allocation6 + $0x50] sm:$0xf]
    %v615 = vld [vmem:[#allocation6 + $0x54] sm:$0xff]
    %v616 = vld [vmem:[#allocation6 + $0x5c] sm:$0xf]
    %v617 = vld [vmem:[#allocation6 + $0x60] sm:$0xff]
    %v618 = vld [vmem:[#allocation6 + $0x68] sm:$0xf]
    %v619 = vld [vmem:[#allocation6 + $0x6c] sm:$0xff]
    %v620 = vld [vmem:[#allocation6 + $0x74] sm:$0xf]
    %v621 = vld [vmem:[#allocation6 + $0x78] sm:$0xff]
    %v622 = vld [vmem:[#allocation6 + $0x80] sm:$0xf]
    %v623 = vld [vmem:[#allocation6 + $0x84] sm:$0xff]
    %v624 = vld [vmem:[#allocation6 + $0x8c] sm:$0xf]
    %v625 = vld [vmem:[#allocation6 + $0x90] sm:$0xff]
    %v626 = vld [vmem:[#allocation6 + $0x98] sm:$0xf]
    %v627 = vld [vmem:[#allocation6 + $0x9c] sm:$0xff]
    %v628 = vld [vmem:[#allocation6 + $0xa4] sm:$0xf]
    %v629 = vld [vmem:[#allocation6 + $0xa8] sm:$0xff]
    %v630 = vld [vmem:[#allocation6 + $0xb0] sm:$0xf]
    %v631 = vld [vmem:[#allocation6 + $0xb4] sm:$0xff]
    %v632 = vld [vmem:[#allocation6 + $0xbc] sm:$0xf]
    %v633 = vpack.c.bf16 %v599, %v597
    %v634 = vld [vmem:[%s6] sm:$0x7]
    %v636 = vperm.slane %v634, 0
    %v637 = vperm.slane %v634, 1
    %v638 = vperm.slane %v634, 2
    %v674 = vunpack.c.l.b16 %v601
    %v675 = vunpack.c.h.b16 %v601
    %v676 = vunpack.c.l.b16 %v602
    %v677 = vunpack.c.l.b16 %v603
    %v678 = vunpack.c.h.b16 %v603
    %v679 = vunpack.c.l.b16 %v604
    %v680 = vunpack.c.l.b16 %v605
    %v681 = vunpack.c.h.b16 %v605
    %v682 = vunpack.c.l.b16 %v606
    %v683 = vunpack.c.l.b16 %v607
    %v684 = vunpack.c.h.b16 %v607
    %v685 = vunpack.c.l.b16 %v608
    %v686 = vunpack.c.l.b16 %v609
    %v687 = vunpack.c.h.b16 %v609
    %v688 = vunpack.c.l.b16 %v610
    %v689 = vunpack.c.l.b16 %v611
    %v690 = vunpack.c.h.b16 %v611
    %v691 = vunpack.c.l.b16 %v612
    %v692 = vunpack.c.l.b16 %v613
    %v693 = vunpack.c.h.b16 %v613
    %v694 = vunpack.c.l.b16 %v614
    %v695 = vunpack.c.l.b16 %v615
    %v696 = vunpack.c.h.b16 %v615
    %v697 = vunpack.c.l.b16 %v616
    %v698 = vunpack.c.l.b16 %v617
    %v699 = vunpack.c.h.b16 %v617
    %v700 = vunpack.c.l.b16 %v618
    %v701 = vunpack.c.l.b16 %v619
    %v702 = vunpack.c.h.b16 %v619
    %v703 = vunpack.c.l.b16 %v620
    %v704 = vunpack.c.l.b16 %v621
    %v705 = vunpack.c.h.b16 %v621
    %v706 = vunpack.c.l.b16 %v622
    %v707 = vunpack.c.l.b16 %v623
    %v708 = vunpack.c.h.b16 %v623
    %v709 = vunpack.c.l.b16 %v624
    %v710 = vunpack.c.l.b16 %v625
    %v711 = vunpack.c.h.b16 %v625
    %v712 = vunpack.c.l.b16 %v626
    %v713 = vunpack.c.l.b16 %v627
    %v714 = vunpack.c.h.b16 %v627
    %v715 = vunpack.c.l.b16 %v628
    %v716 = vunpack.c.l.b16 %v629
    %v717 = vunpack.c.h.b16 %v629
    %v718 = vunpack.c.l.b16 %v630
    %v719 = vunpack.c.l.b16 %v631
    %v720 = vunpack.c.h.b16 %v631
    %v721 = vunpack.c.l.b16 %v632
    %v722 = vpack.c.b16 %v677, %v674
    %v723 = vpack.c.b16 %v678, %v675
    %v724 = vpack.c.b16 %v679, %v676
    %v725 = vpack.c.b16 %v683, %v680
    %v726 = vpack.c.b16 %v684, %v681
    %v727 = vpack.c.b16 %v685, %v682
    %v728 = vpack.c.b16 %v689, %v686
    %v729 = vpack.c.b16 %v690, %v687
    %v730 = vpack.c.b16 %v691, %v688
    %v731 = vpack.c.b16 %v695, %v692
    %v732 = vpack.c.b16 %v696, %v693
    %v733 = vpack.c.b16 %v697, %v694
    %v734 = vpack.c.b16 %v701, %v698
    %v735 = vpack.c.b16 %v702, %v699
    %v736 = vpack.c.b16 %v703, %v700
    %v737 = vpack.c.b16 %v707, %v704
    %v738 = vpack.c.b16 %v708, %v705
    %v739 = vpack.c.b16 %v709, %v706
    %v740 = vpack.c.b16 %v713, %v710
    %v741 = vpack.c.b16 %v714, %v711
    %v742 = vpack.c.b16 %v715, %v712
    %v743 = vpack.c.b16 %v719, %v716
    %v744 = vpack.c.b16 %v720, %v717
    %v745 = vpack.c.b16 %v721, %v718
    %770 = vmatpush.bf16.msra.mxu0 %v743
    %771 = vmatpush.bf16.msra.mxu0 %v740
    %772 = vmatpush.bf16.msra.mxu0 %v737
    %773 = vmatpush.bf16.msra.mxu0 %v734
    %774 = vmatpush.bf16.msra.mxu0 %v731
    %775 = vmatpush.bf16.msra.mxu0 %v728
    %776 = vmatpush.bf16.msra.mxu0 %v725
    %777 = vmatpush.bf16.msra.mxu0 %v722
    %778 = vmatmul.bf16.gmra.mxu0 %v633
    %v779 = vpop.f32.mrf.mxu0
    %v780 = vadd.f32 %v636, %v779
    %v781 = vpop.f32.mrf.mxu0
    %v782 = vadd.f32 %v636, %v781
    %783 = vdwg.mxu0
    %784 = vmatpush.bf16.msra.mxu0 %v744
    %785 = vmatpush.bf16.msra.mxu0 %v741
    %786 = vmatpush.bf16.msra.mxu0 %v738
    %787 = vmatpush.bf16.msra.mxu0 %v735
    %788 = vmatpush.bf16.msra.mxu0 %v732
    %789 = vmatpush.bf16.msra.mxu0 %v729
    %790 = vmatpush.bf16.msra.mxu0 %v726
    %791 = vmatpush.bf16.msra.mxu0 %v723
    %792 = vmatmul.bf16.gmra.mxu0 %v633
    %v793 = vpop.f32.mrf.mxu0
    %v794 = vadd.f32 %v637, %v793
    %v795 = vpop.f32.mrf.mxu0
    %v796 = vadd.f32 %v637, %v795
    %797 = vdwg.mxu0
    %798 = vmatpush.bf16.msra.mxu0 %v745
    %799 = vmatpush.bf16.msra.mxu0 %v742
    %800 = vmatpush.bf16.msra.mxu0 %v739
    %801 = vmatpush.bf16.msra.mxu0 %v736
    %802 = vmatpush.bf16.msra.mxu0 %v733
    %803 = vmatpush.bf16.msra.mxu0 %v730
    %804 = vmatpush.bf16.msra.mxu0 %v727
    %805 = vmatpush.bf16.msra.mxu0 %v724
    %806 = vmatmul.bf16.gmra.mxu0 %v633
    %v807 = vpop.f32.mrf.mxu0
    %v808 = vadd.f32 %v638, %v807
    %v809 = vpop.f32.mrf.mxu0
    %v810 = vadd.f32 %v638, %v809
    %811 = vdwg.mxu0
    %v812 = vpack.c.bf16 %v780, %v780
    %v813 = vpack.c.bf16 %v782, %v782
    %v814 = vpack.c.bf16 %v794, %v794
    %v815 = vpack.c.bf16 %v796, %v796
    %816 = vmatpush.bf16.xpose.msra.mxu0 0
    %817 = vmatpush.bf16.xpose.msra.mxu0 0
    %818 = vmatpush.bf16.xpose.msra.mxu0 0
    %819 = vmatpush.bf16.xpose.msra.mxu0 0
    %820 = vmatpush.bf16.xpose.msra.mxu0 0
    %821 = vmatpush.bf16.xpose.msra.mxu0 0
    %822 = vmatpush.bf16.xpose.msra.mxu0 0
    %823 = vmatpush.bf16.xpose.msra.mxu0 %v814
    %824 = vmatmul.bf16.gmra.mxu0 %v812
    %v825 = vpop.f32.mrf.mxu0
    %v826 = vadd.f32 0.0, %v825
    %v827 = vpop.f32.mrf.mxu0
    %828 = vdwg.mxu0
    %829 = vmatpush.bf16.xpose.msra.mxu0 0
    %830 = vmatpush.bf16.xpose.msra.mxu0 0
    %831 = vmatpush.bf16.xpose.msra.mxu0 0
    %832 = vmatpush.bf16.xpose.msra.mxu0 0
    %833 = vmatpush.bf16.xpose.msra.mxu0 0
    %834 = vmatpush.bf16.xpose.msra.mxu0 0
    %835 = vmatpush.bf16.xpose.msra.mxu0 0
    %836 = vmatpush.bf16.xpose.msra.mxu0 %v815
    %837 = vmatmul.bf16.gmra.mxu0 %v813
    %v838 = vpop.f32.mrf.mxu0
    %v839 = vadd.f32 0.0, %v838
    %v840 = vpop.f32.mrf.mxu0
    %841 = vdwg.mxu0
    %vm842 = vcmask 64512
    %v843 = vsel %vm842, %v826, -inf
    %844 = vmax.xlane.f32.xlu0 %v843
    %v845 = vpop.xlane.xlu0 %844
    %v846 = vsel %vm842, %v839, -inf
    %847 = vmax.xlane.f32.xlu0 %v846
    %v848 = vpop.xlane.xlu0 %847
    %v849 = vsub.f32 %v826, %v845
    %v850 = vsub.f32 %v839, %v848
    %v851 = vmul.f32 %v849, 1.442695
    %v852 = vpow.pop %v851
    %v853 = vmul.f32 %v850, 1.442695
    %v854 = vpow.pop %v853
    %v855 = vsel %vm842, %v852, 0.0
    %856 = vadd.xlane.f32.xlu0 %v855
    %v857 = vpop.xlane.xlu0 %856
    %v858 = vsel %vm842, %v854, 0.0
    %859 = vadd.xlane.f32.xlu0 %v858
    %v860 = vpop.xlane.xlu0 %859
    %v861 = vrcp.pop %v857
    %v862 = vrcp.pop %v860
    %v863 = vmul.f32 %v852, %v861
    %v864 = vmul.f32 %v854, %v862
    %v865 = vpack.c.bf16 %v863, %v863
    %v866 = vpack.c.bf16 %v864, %v864
    %v867 = vpack.c.bf16 %v808, %v808
    %v868 = vpack.c.bf16 %v810, %v810
    %v870 = vsel %vm842, %v865, 0
    %vm872 = vcmask 1043456
    %v874 = vsel %vm872, %v867, 0
    %876 = vmatpush.bf16.msra.mxu0 0
    %877 = vmatpush.bf16.msra.mxu0 0
    %878 = vmatpush.bf16.msra.mxu0 0
    %879 = vmatpush.bf16.msra.mxu0 0
    %880 = vmatpush.bf16.msra.mxu0 0
    %881 = vmatpush.bf16.msra.mxu0 0
    %882 = vmatpush.bf16.msra.mxu0 0
    %883 = vmatpush.bf16.msra.mxu0 %v874
    %884 = vmatmul.bf16.gmra.mxu0 %v870
    %v885 = vpop.f32.mrf.mxu0
    %v886 = vadd.f32 0.0, %v885
    %v887 = vpop.f32.mrf.mxu0
    %888 = vdwg.mxu0
    %v890 = vsel %vm842, %v866, 0
    %v893 = vsel %vm872, %v868, 0
    %895 = vmatpush.bf16.msra.mxu0 0
    %896 = vmatpush.bf16.msra.mxu0 0
    %897 = vmatpush.bf16.msra.mxu0 0
    %898 = vmatpush.bf16.msra.mxu0 0
    %899 = vmatpush.bf16.msra.mxu0 0
    %900 = vmatpush.bf16.msra.mxu0 0
    %901 = vmatpush.bf16.msra.mxu0 0
    %902 = vmatpush.bf16.msra.mxu0 %v893
    %903 = vmatmul.bf16.gmra.mxu0 %v890
    %v904 = vpop.f32.mrf.mxu0
    %v905 = vadd.f32 0.0, %v904
    %v906 = vpop.f32.mrf.mxu0
    %907 = vdwg.mxu0
    %v908 = vadd.f32 %v597, %v886
    %v909 = vadd.f32 %v599, %v905
    %s910 = scalar_lea.vmem [#allocation2], 192
    %v911 = vld [vmem:[%s910] sm:$0xf]
    %v912 = vld [vmem:[%s910 + $0x4] sm:$0xf]
    %v913 = vld [vmem:[%s910 + $0x8] sm:$0xf]
    %v914 = vld [vmem:[%s910 + $0xc] sm:$0xf]
    %v915 = vld [vmem:[%s910 + $0x10] sm:$0xf]
    %v916 = vld [vmem:[%s910 + $0x14] sm:$0xf]
    %v917 = vld [vmem:[%s910 + $0x18] sm:$0xf]
    %v918 = vld [vmem:[%s910 + $0x1c] sm:$0xf]
    %v919 = vld [vmem:[%s910 + $0x20] sm:$0xf]
    %v920 = vld [vmem:[%s910 + $0x24] sm:$0xf]
    %v921 = vld [vmem:[%s910 + $0x28] sm:$0xf]
    %v922 = vld [vmem:[%s910 + $0x2c] sm:$0xf]
    %v923 = vld [vmem:[%s910 + $0x30] sm:$0xf]
    %v924 = vld [vmem:[%s910 + $0x34] sm:$0xf]
    %v925 = vld [vmem:[%s910 + $0x38] sm:$0xf]
    %v926 = vld [vmem:[%s910 + $0x3c] sm:$0xf]
    %v927 = vpack.c.bf16 %v909, %v908
    %v944 = vunpack.c.l.b16 %v911
    %v945 = vunpack.c.l.b16 %v912
    %v946 = vunpack.c.l.b16 %v913
    %v947 = vunpack.c.l.b16 %v914
    %v948 = vunpack.c.l.b16 %v915
    %v949 = vunpack.c.l.b16 %v916
    %v950 = vunpack.c.l.b16 %v917
    %v951 = vunpack.c.l.b16 %v918
    %v952 = vunpack.c.l.b16 %v919
    %v953 = vunpack.c.l.b16 %v920
    %v954 = vunpack.c.l.b16 %v921
    %v955 = vunpack.c.l.b16 %v922
    %v956 = vunpack.c.l.b16 %v923
    %v957 = vunpack.c.l.b16 %v924
    %v958 = vunpack.c.l.b16 %v925
    %v959 = vunpack.c.l.b16 %v926
    %v960 = vpack.c.b16 %v945, %v944
    %v961 = vpack.c.b16 %v947, %v946
    %v962 = vpack.c.b16 %v949, %v948
    %v963 = vpack.c.b16 %v951, %v950
    %v964 = vpack.c.b16 %v953, %v952
    %v965 = vpack.c.b16 %v955, %v954
    %v966 = vpack.c.b16 %v957, %v956
    %v967 = vpack.c.b16 %v959, %v958
    %976 = vmatpush.bf16.msra.mxu0 %v967
    %977 = vmatpush.bf16.msra.mxu0 %v966
    %978 = vmatpush.bf16.msra.mxu0 %v965
    %979 = vmatpush.bf16.msra.mxu0 %v964
    %980 = vmatpush.bf16.msra.mxu0 %v963
    %981 = vmatpush.bf16.msra.mxu0 %v962
    %982 = vmatpush.bf16.msra.mxu0 %v961
    %983 = vmatpush.bf16.msra.mxu0 %v960
    %984 = vmatmul.bf16.gmra.mxu0 %v927
    %v985 = vpop.f32.mrf.mxu0
    %v986 = vadd.f32 0.0, %v985
    %v987 = vpop.f32.mrf.mxu0
    %v988 = vadd.f32 0.0, %v987
    %989 = vdwg.mxu0
    %v990 = vrot.slane %v986, 4
    %v991 = vadd.f32 %v986, %v990
    %v992 = vrot.slane %v991, 2
    %v993 = vadd.f32 %v991, %v992
    %v994 = vrot.slane %v993, 1
    %v995 = vadd.f32 %v993, %v994
    %v996 = vrot.slane %v988, 4
    %v997 = vadd.f32 %v988, %v996
    %v998 = vrot.slane %v997, 2
    %v999 = vadd.f32 %v997, %v998
    %v1000 = vrot.slane %v999, 1
    %v1001 = vadd.f32 %v999, %v1000
    %v1002 = vmul.f32 %v995, 0.125
    %v1003 = vmul.f32 %v1001, 0.125
    %v1004 = vsub.f32 %v986, %v1002
    %v1005 = vsub.f32 %v988, %v1003
    %v1006 = vmul.f32 %v1004, %v1004
    %v1007 = vmul.f32 %v1005, %v1005
    %v1008 = vrot.slane %v1006, 4
    %v1009 = vadd.f32 %v1006, %v1008
    %v1010 = vrot.slane %v1009, 2
    %v1011 = vadd.f32 %v1009, %v1010
    %v1012 = vrot.slane %v1011, 1
    %v1013 = vadd.f32 %v1011, %v1012
    %v1014 = vrot.slane %v1007, 4
    %v1015 = vadd.f32 %v1007, %v1014
    %v1016 = vrot.slane %v1015, 2
    %v1017 = vadd.f32 %v1015, %v1016
    %v1018 = vrot.slane %v1017, 1
    %v1019 = vadd.f32 %v1017, %v1018
    %v1020 = vmul.f32 %v1013, 0.125
    %v1021 = vmul.f32 %v1019, 0.125
    %s1022 = scalar_lea.vmem %s2, 6
    %v1023 = vld [vmem:[%s1022] sm:$0x3]
    %v1024 = vadd.f32 %v1020, 1e-05
    %v1025 = vadd.f32 %v1021, 1e-05
    %v1026 = vrsqrt.pop %v1024
    %v1027 = vmul.f32 %v1026, %v1024
    %v1028 = vmul.f32 %v1027, %v1026
    %v1029 = vmul.f32 0.5, %v1028
    %v1030 = vsub.f32 1.5, %v1029
    %v1031 = vmul.f32 %v1026, %v1030
    %vm1032 = vweird.f32 %v1024
    %vm1033 = vweird.f32 %v1026
    %vm1034 = vmor %vm1032, %vm1033
    %v1035 = vsel %vm1034, %v1026, %v1031
    %v1036 = vrsqrt.pop %v1025
    %v1037 = vmul.f32 %v1036, %v1025
    %v1038 = vmul.f32 %v1037, %v1036
    %v1039 = vmul.f32 0.5, %v1038
    %v1040 = vsub.f32 1.5, %v1039
    %v1041 = vmul.f32 %v1036, %v1040
    %vm1042 = vweird.f32 %v1025
    %vm1043 = vweird.f32 %v1036
    %vm1044 = vmor %vm1042, %vm1043
    %v1045 = vsel %vm1044, %v1036, %v1041
    %v1046 = vmul.f32 %v1023, %v1035
    %v1047 = vmul.f32 %v1023, %v1045
    %v1048 = vperm.slane %v1046, 0
    %v1049 = vperm.slane %v1047, 0
    %v1050 = vmul.f32 %v1004, %v1048
    %v1051 = vmul.f32 %v1005, %v1049
    %v1052 = vperm.slane %v1023, 1
    %v1053 = vadd.f32 %v1050, %v1052
    %v1054 = vadd.f32 %v1051, %v1052
    %v1055 = vmax.f32 %v1053, 0.0
    %v1056 = vmax.f32 %v1054, 0.0
    %s1057 = scalar_lea.vmem [#allocation4], 64
    %v1058 = vld [vmem:[%s1057] sm:$0xf]
    %v1059 = vld [vmem:[%s1057 + $0x4] sm:$0xf]
    %v1060 = vld [vmem:[%s1057 + $0x8] sm:$0xf]
    %v1061 = vld [vmem:[%s1057 + $0xc] sm:$0xf]
    %v1062 = vld [vmem:[%s1057 + $0x10] sm:$0xf]
    %v1063 = vld [vmem:[%s1057 + $0x14] sm:$0xf]
    %v1064 = vld [vmem:[%s1057 + $0x18] sm:$0xf]
    %v1065 = vld [vmem:[%s1057 + $0x1c] sm:$0xf]
    %v1066 = vld [vmem:[%s1057 + $0x20] sm:$0xf]
    %v1067 = vld [vmem:[%s1057 + $0x24] sm:$0xf]
    %v1068 = vld [vmem:[%s1057 + $0x28] sm:$0xf]
    %v1069 = vld [vmem:[%s1057 + $0x2c] sm:$0xf]
    %v1070 = vld [vmem:[%s1057 + $0x30] sm:$0xf]
    %v1071 = vld [vmem:[%s1057 + $0x34] sm:$0xf]
    %v1072 = vld [vmem:[%s1057 + $0x38] sm:$0xf]
    %v1073 = vld [vmem:[%s1057 + $0x3c] sm:$0xf]
    %v1074 = vpack.c.bf16 %v1056, %v1055
    %v1075 = vld [vmem:[%s4 + $0x1] sm:$0x1]
    %v1076 = vperm.slane %v1075, 0
    %v1093 = vunpack.c.l.b16 %v1058
    %v1094 = vunpack.c.l.b16 %v1059
    %v1095 = vunpack.c.l.b16 %v1060
    %v1096 = vunpack.c.l.b16 %v1061
    %v1097 = vunpack.c.l.b16 %v1062
    %v1098 = vunpack.c.l.b16 %v1063
    %v1099 = vunpack.c.l.b16 %v1064
    %v1100 = vunpack.c.l.b16 %v1065
    %v1101 = vunpack.c.l.b16 %v1066
    %v1102 = vunpack.c.l.b16 %v1067
    %v1103 = vunpack.c.l.b16 %v1068
    %v1104 = vunpack.c.l.b16 %v1069
    %v1105 = vunpack.c.l.b16 %v1070
    %v1106 = vunpack.c.l.b16 %v1071
    %v1107 = vunpack.c.l.b16 %v1072
    %v1108 = vunpack.c.l.b16 %v1073
    %v1109 = vpack.c.b16 %v1094, %v1093
    %v1110 = vpack.c.b16 %v1096, %v1095
    %v1111 = vpack.c.b16 %v1098, %v1097
    %v1112 = vpack.c.b16 %v1100, %v1099
    %v1113 = vpack.c.b16 %v1102, %v1101
    %v1114 = vpack.c.b16 %v1104, %v1103
    %v1115 = vpack.c.b16 %v1106, %v1105
    %v1116 = vpack.c.b16 %v1108, %v1107
    %1125 = vmatpush.bf16.msra.mxu0 %v1116
    %1126 = vmatpush.bf16.msra.mxu0 %v1115
    %1127 = vmatpush.bf16.msra.mxu0 %v1114
    %1128 = vmatpush.bf16.msra.mxu0 %v1113
    %1129 = vmatpush.bf16.msra.mxu0 %v1112
    %1130 = vmatpush.bf16.msra.mxu0 %v1111
    %1131 = vmatpush.bf16.msra.mxu0 %v1110
    %1132 = vmatpush.bf16.msra.mxu0 %v1109
    %1133 = vmatmul.bf16.gmra.mxu0 %v1074
    %v1134 = vpop.f32.mrf.mxu0
    %v1135 = vadd.f32 %v1076, %v1134
    %v1136 = vpop.f32.mrf.mxu0
    %v1137 = vadd.f32 %v1076, %v1136
    %1138 = vdwg.mxu0
    %1139 = vst [vmem:[%s7] sm:$0xff] %v1135
    %1140 = vst [vmem:[%s7 + $0x8] sm:$0xff] %v1137
    // Predicated region
    $region42: #{sslnet_forward.1} parent=1 // pred_check
      _
    $region43: #{sslnet_forward.1} parent=1 // pred_check_branch
      %1142 = sbr.rel (0) target = $region45
    $region44: #{sslnet_forward.1} parent=1 // pred_region
      _
    $region45: #{sslnet_forward.1} parent=1 // pred_fallthru
      _
    // Predicated region
    $region46: #{sslnet_forward.1} parent=1 // pred_check
      _
    $region47: #{sslnet_forward.1} parent=1 // pred_check_branch
      %1144 = sbr.rel (0) target = $region49
    $region48: #{sslnet_forward.1} parent=1 // pred_region
      _
    $region49: #{sslnet_forward.1} parent=1 // pred_fallthru
      _
    %1145 = vsyncpa [#allocation3], 1
    %1146 = vsyncpa [#allocation5], 1

</llo_original>
